<compile_context>
chip_gen: v5e
topology: v5e:2x2
jax: 0.10.0
libtpu: 0.0.40
codegen_flags: <defaults>
</compile_context>

<pallas_src>
import numpy as np
import jax
import jax.numpy as jnp
from jax import lax
from jax.experimental import pallas as pl
from jax.experimental.pallas import tpu as pltpu


def _round_up(x, m):
    return (x + m - 1) // m * m


# ---------------------------------------------------------------------------
# Config builder (mirrors SplittedLora.__init__)
# ---------------------------------------------------------------------------
def build_config(batch_sizes, rs, num_adapters, in_features, out_features):
    r_min = min(rs)
    split_lengths, sum_split = [], []
    for i, r in enumerate(rs):
        r_mult = int(r / r_min)
        if r_mult == 1:
            sum_split.append(False)
            split_lengths.append(batch_sizes[i])
        else:
            for _ in range(batch_sizes[i]):
                sum_split.append(True)
                split_lengths.append(r_mult)
    split_indices = np.cumsum(split_lengths)[:-1].tolist()
    lora_batch_size = int(sum(split_lengths))
    num_splitted_adapters = sum(
        num_adapters[i] * int(rs[i] / r_min) for i in range(len(rs))
    )
    batch_size = int(sum(batch_sizes))

    # Map every lora-batch row l -> output row (contributions to a row are summed).
    out_rows = []
    row = 0
    for length, do_sum in zip(split_lengths, sum_split):
        if do_sum:
            out_rows.extend([row] * length)
            row += 1
        else:
            for _ in range(length):
                out_rows.append(row)
                row += 1
    assert row == batch_size

    return dict(
        batch_size=batch_size,
        lora_batch_size=lora_batch_size,
        num_splitted_adapters=num_splitted_adapters,
        r_min=r_min,
        in_features=in_features,
        out_features=out_features,
        split_indices=split_indices,
        sum_split=sum_split,
        out_rows=np.asarray(out_rows, np.int32),
    )


# ---------------------------------------------------------------------------
# Host-side grouping plan: rows grouped by adapter chunk (wid), padded to tile_m.
# ---------------------------------------------------------------------------
def build_plan(xids, wids, out_rows, batch_size, tile_m):
    xids = np.asarray(xids, np.int32)
    wids = np.asarray(wids, np.int32)
    out_rows = np.asarray(out_rows, np.int32)
    order = np.argsort(wids, kind="stable")

    gwid, src, dst = [], [], []
    i, L = 0, len(order)
    while i < L:
        w = int(wids[order[i]])
        j = i
        while j < L and int(wids[order[j]]) == w and (j - i) < tile_m:
            j += 1
        rows = order[i:j]
        pad = tile_m - len(rows)
        gwid.append(w)
        # Padded slots read the appended all-zero x row (index batch_size) and
        # scatter into the dummy accumulator row (index batch_size, dropped later).
        src.extend([int(xids[r]) for r in rows] + [batch_size] * pad)
        dst.extend([int(out_rows[r]) for r in rows] + [batch_size] * pad)
        i = j

    return (np.asarray(gwid, np.int32),
            np.asarray(src, np.int32),
            np.asarray(dst, np.int32))


# ---------------------------------------------------------------------------
# Pallas kernel (grid = (F_out tiles, adapter-chunk groups))
# ---------------------------------------------------------------------------
def _make_kernel(tile_m, b_pad):
    def kernel(gwid_ref, x_ref, dst_ref, a_ref, b_ref, z_ref):
        g = pl.program_id(1)

        # Output block is resident across the (last, "arbitrary") group axis:
        # initialize at the first group, accumulate every group.
        @pl.when(g == 0)
        def _():
            z_ref[...] = jnp.zeros_like(z_ref)

        x_blk = x_ref[...]      # (tile_m, F_in)   bf16, gathered+wid-sorted rows
        a_blk = a_ref[0]        # (R, F_in)        bf16, lane-dense in_features
        b_blk = b_ref[0]        # (R, tile_n)      bf16, *2.0 scale pre-folded

        # (tile_m, F_in) . (R, F_in) contracted on F_in -> (tile_m, R), f32 acc.
        xa = lax.dot_general(x_blk, a_blk, (((1,), (1,)), ((), ())),
                             preferred_element_type=jnp.float32)
        # (tile_m, R) @ (R, tile_n) -> (tile_m, tile_n), f32 acc.
        y = jnp.dot(xa.astype(jnp.bfloat16), b_blk,
                    preferred_element_type=jnp.float32)

        # One-hot MXU scatter: S[d, m] = 1 iff dst[g, m] == d, then z += S @ y.
        dst_row = dst_ref[pl.ds(g, 1), :]                               # (1, tile_m) i32
        rows = lax.broadcasted_iota(jnp.int32, (b_pad, tile_m), 0)      # (b_pad, tile_m)
        scat = (rows == dst_row).astype(jnp.bfloat16)                   # one-hot bf16

        z_ref[...] += jnp.dot(scat, y.astype(jnp.bfloat16),
                              preferred_element_type=jnp.float32)

    return kernel


def splitted_lora_forward(x, xids, wids, lora_A, lora_B, cfg,
                          tile_m=128, tile_n=512):
    B = cfg["batch_size"]
    F_in = cfg["in_features"]
    F_out = cfg["out_features"]
    R = cfg["r_min"]

    tile_n = min(tile_n, F_out)
    assert F_out % tile_n == 0
    num_n = F_out // tile_n
    b_pad = _round_up(B + 1, 8)          # +1 dummy row for padded scatter targets

    gwid, src, dst = build_plan(xids, wids, cfg["out_rows"], B, tile_m)
    num_groups = int(gwid.shape[0])
    assert num_groups >= 1

    # op.take(x, xids) fused with the wid-sorted / tile_m-padded ordering; gather on
    # the original fp16 rows so the bf16 cast fuses and only one intermediate exists.
    # TODO(synk): replace with an in-kernel DMA gather (x in pl.ANY + per-row
    # make_async_copy driven by the src table) to drop this extra HBM pass at
    # deployment shapes.
    x_rows = x[:, 0, :]                                                   # (B, F_in) fp16
    x_aug = jnp.concatenate([x_rows, jnp.zeros((1, F_in), x_rows.dtype)], axis=0)
    x_sorted = jnp.take(x_aug, jnp.asarray(src), axis=0).astype(jnp.bfloat16)

    # bf16 weights (native MXU input); lora_A transposed so in_features is lane-dense;
    # the *2.0 output scale is folded into the (already required) bf16 cast of lora_B.
    # TODO(synk): fuse r_mult rank chunks per group (stack chunk slabs to
    # (r_full, F_in)/(r_full, F_out)) to cut duplicated x rows and raise MXU K/N use.
    a_t = jnp.transpose(lora_A, (0, 2, 1)).astype(jnp.bfloat16)           # (N, R, F_in)
    b_s = (lora_B.astype(jnp.float32) * 2.0).astype(jnp.bfloat16)         # (N, R, F_out)

    dst2d = jnp.asarray(dst.reshape(num_groups, tile_m))                  # (G, tile_m) i32

    grid_spec = pltpu.PrefetchScalarGridSpec(
        num_scalar_prefetch=1,            # gwid -> SMEM, drives A/B index_maps
        grid=(num_n, num_groups),         # reduction (group) axis last
        in_specs=[
            # pre-gathered x rows for this group
            pl.BlockSpec((tile_m, F_in), lambda n, g, gwid: (g, 0)),
            # full dst table stays resident in VMEM (tiny); sliced per group in-kernel
            pl.BlockSpec((num_groups, tile_m), lambda n, g, gwid: (0, 0)),
            # adapter-chunk A^T slab (re-DMA skipped when consecutive groups share wid)
            pl.BlockSpec((1, R, F_in), lambda n, g, gwid: (gwid[g], 0, 0)),
            # adapter-chunk B slab, F_out-tiled
            pl.BlockSpec((1, R, tile_n), lambda n, g, gwid: (gwid[g], 0, n)),
        ],
        # f32 output block doubles as the accumulator; resident across the group axis.
        out_specs=pl.BlockSpec((b_pad, tile_n), lambda n, g, gwid: (0, n)),
    )

    z_pad = pl.pallas_call(
        _make_kernel(tile_m, b_pad),
        out_shape=jax.ShapeDtypeStruct((b_pad, F_out), jnp.float32),
        grid_spec=grid_spec,
        compiler_params=pltpu.CompilerParams(
            # F_out tiles are independent (megacore-parallel on v7x);
            # the group axis accumulates into the resident output block.
            dimension_semantics=("parallel", "arbitrary"),
        ),
    )(jnp.asarray(gwid), x_sorted, dst2d, a_t, b_s)

    # Drop the dummy row, cast to fp16 in the consumer, restore (B, 1, F_out).
    return z_pad[:B].astype(jnp.float16).reshape(B, 1, F_out)


# ---------------------------------------------------------------------------
# Pure-JAX reference (mirrors the TVM relax forward)
# ---------------------------------------------------------------------------
def reference_forward(x, xids, wids, lora_A, lora_B, cfg):
    y = jnp.matmul(jnp.take(x, xids, axis=0).astype(jnp.float32),
                   jnp.take(lora_A, wids, axis=0).astype(jnp.float32))
    y = jnp.matmul(y, jnp.take(lora_B, wids, axis=0).astype(jnp.float32)) * 2.0
    ys = jnp.split(y, cfg["split_indices"], axis=0)
    zs = [jnp.sum(yi, axis=0, keepdims=True) if s else yi
          for yi, s in zip(ys, cfg["sum_split"])]
    return jnp.concatenate(zs, axis=0).astype(jnp.float16)


# ---------------------------------------------------------------------------
if __name__ == "__main__":
    # Two adapter groups: rank 4 (the min rank) and rank 8 (split into 2 chunks).
    batch_sizes = [2, 2]
    rs = [4, 8]
    num_adapters = [2, 1]
    in_features = 128     # lane-dense (multiple of 128)
    out_features = 128

    cfg = build_config(batch_sizes, rs, num_adapters, in_features, out_features)

    key = jax.random.PRNGKey(0)
    kx, ka, kb = jax.random.split(key, 3)

    def bf16_exact_fp16(k, shape, scale):
        # fp16 values exactly representable in bf16 -> tight kernel/ref match.
        v = jax.random.normal(k, shape, jnp.float32) * scale
        return v.astype(jnp.bfloat16).astype(jnp.float16)

    x = bf16_exact_fp16(kx, (cfg["batch_size"], 1, in_features), 1.0)
    lora_A = bf16_exact_fp16(ka, (cfg["num_splitted_adapters"], in_features, cfg["r_min"]), 0.1)
    lora_B = bf16_exact_fp16(kb, (cfg["num_splitted_adapters"], cfg["r_min"], out_features), 0.1)

    # Lora-batch layout: batch rows 0,1 use rank-4 adapters 0,1 (one chunk each);
    # batch rows 2,3 use the rank-8 adapter (splitted adapter ids 2,3 -> two chunks each).
    xids = np.asarray([0, 1, 2, 2, 3, 3], np.int32)
    wids = np.asarray([0, 1, 2, 3, 2, 3], np.int32)
    assert xids.shape[0] == cfg["lora_batch_size"]

    z = splitted_lora_forward(x, xids, wids, lora_A, lora_B, cfg)
    jax.block_until_ready(z)

    z_ref = reference_forward(x, jnp.asarray(xids), jnp.asarray(wids), lora_A, lora_B, cfg)
    np.testing.assert_allclose(np.asarray(z, np.float32),
                               np.asarray(z_ref, np.float32),
                               rtol=2e-2, atol=2e-2)

    print("KERNEL_OK")
</pallas_src>

<mosaic_0001>
module attributes {stable_mosaic.version = 11 : i64} {
  func.func @kernel(%arg0: i32, %arg1: i32, %arg2: memref<4xi32, #tpu.memory_space<smem>>, %arg3: memref<128x128xbf16, #tpu.memory_space<vmem>>, %arg4: memref<4x128xi32, #tpu.memory_space<vmem>>, %arg5: memref<1x4x128xbf16, #tpu.memory_space<vmem>>, %arg6: memref<1x4x128xbf16, #tpu.memory_space<vmem>>, %arg7: memref<8x128xf32, #tpu.memory_space<vmem>>) attributes {dimension_semantics = [#tpu.dimension_semantics<parallel>, #tpu.dimension_semantics<arbitrary>], iteration_bounds = array<i64: 1, 4>, scalar_prefetch = 1 : i64, scratch_operands = 0 : i64, tpu.core_type = #tpu.core_type<tc>, window_params = [{transform_indices = @transform_0, window_bounds = array<i64: 128, 128>}, {pipeline_mode = #tpu.pipeline_mode<synchronous>, transform_indices = @transform_1, window_bounds = array<i64: 4, 128>}, {transform_indices = @transform_2, window_bounds = array<i64: 1, 4, 128>}, {transform_indices = @transform_3, window_bounds = array<i64: 1, 4, 128>}, {transform_indices = @transform_4, window_bounds = array<i64: 8, 128>}]} {
    %c0_i32 = arith.constant 0 : i32
    %0 = arith.cmpi eq, %arg1, %c0_i32 : i32
    %1 = arith.extui %0 : i1 to i32
    %c0_i32_0 = arith.constant 0 : i32
    %2 = arith.cmpi ne, %1, %c0_i32_0 : i32
    scf.if %2 {
      %cst_15 = arith.constant 0.000000e+00 : f32
      %24 = vector.broadcast %cst_15 : f32 to vector<8x128xf32>
      %c0_16 = arith.constant 0 : index
      %c0_17 = arith.constant 0 : index
      %25 = vector.load %arg7[%c0_16, %c0_17] : memref<8x128xf32, #tpu.memory_space<vmem>>, vector<8x128xf32>
      tpu.vector_store %arg7[%c0_16, %c0_17], %24 {strides = array<i32>} : memref<8x128xf32, #tpu.memory_space<vmem>>, vector<8x128xf32>,
    } else {
    }
    %c0 = arith.constant 0 : index
    %c0_1 = arith.constant 0 : index
    %3 = vector.load %arg3[%c0, %c0_1] : memref<128x128xbf16, #tpu.memory_space<vmem>>, vector<128x128xbf16>
    %c0_2 = arith.constant 0 : index
    %c0_3 = arith.constant 0 : index
    %c0_4 = arith.constant 0 : index
    %4 = vector.load %arg5[%c0_2, %c0_3, %c0_4] : memref<1x4x128xbf16, #tpu.memory_space<vmem>>, vector<1x4x128xbf16>
    %5 = vector.shape_cast %4 : vector<1x4x128xbf16> to vector<4x128xbf16>
    %c0_5 = arith.constant 0 : index
    %c0_6 = arith.constant 0 : index
    %c0_7 = arith.constant 0 : index
    %6 = vector.load %arg6[%c0_5, %c0_6, %c0_7] : memref<1x4x128xbf16, #tpu.memory_space<vmem>>, vector<1x4x128xbf16>
    %7 = vector.shape_cast %6 : vector<1x4x128xbf16> to vector<4x128xbf16>
    %cst = arith.constant dense<0.000000e+00> : vector<128x4xf32>
    %8 = tpu.matmul %3, %5, %cst {dimension_numbers = #tpu.dot_dimension_numbers<[1], [1], [0], [0], [0, 0, 1, 0], [], []>} : vector<128x128xbf16>, vector<4x128xbf16>, vector<128x4xf32> -> vector<128x4xf32>
    %9 = arith.truncf %8 : vector<128x4xf32> to vector<128x4xbf16>
    %cst_8 = arith.constant dense<0.000000e+00> : vector<128x128xf32>
    %10 = tpu.matmul %9, %7, %cst_8 {dimension_numbers = #tpu.dot_dimension_numbers<[1], [0], [0], [1], [0, 0, 1, 1], [], []>} : vector<128x4xbf16>, vector<4x128xbf16>, vector<128x128xf32> -> vector<128x128xf32>
    %11 = arith.index_cast %arg1 : i32 to index
    %c0_9 = arith.constant 0 : index
    %12 = vector.load %arg4[%11, %c0_9] : memref<4x128xi32, #tpu.memory_space<vmem>>, vector<1x128xi32>
    %13 = tpu.iota {dimensions = array<i32: 0>} : vector<8x128xi32>
    %14 = vector.broadcast %12 : vector<1x128xi32> to vector<8x128xi32>
    %15 = arith.cmpi eq, %13, %14 : vector<8x128xi32>
    %16 = arith.extui %15 : vector<8x128xi1> to vector<8x128xi32>
    %17 = arith.sitofp %16 : vector<8x128xi32> to vector<8x128xf32>
    %18 = arith.truncf %17 : vector<8x128xf32> to vector<8x128xbf16>
    %c0_10 = arith.constant 0 : index
    %c0_11 = arith.constant 0 : index
    %19 = vector.load %arg7[%c0_10, %c0_11] : memref<8x128xf32, #tpu.memory_space<vmem>>, vector<8x128xf32>
    %20 = arith.truncf %10 : vector<128x128xf32> to vector<128x128xbf16>
    %cst_12 = arith.constant dense<0.000000e+00> : vector<8x128xf32>
    %21 = tpu.matmul %18, %20, %cst_12 {dimension_numbers = #tpu.dot_dimension_numbers<[1], [0], [0], [1], [0, 0, 1, 1], [], []>} : vector<8x128xbf16>, vector<128x128xbf16>, vector<8x128xf32> -> vector<8x128xf32>
    %22 = arith.addf %19, %21 : vector<8x128xf32>
    %c0_13 = arith.constant 0 : index
    %c0_14 = arith.constant 0 : index
    %23 = vector.load %arg7[%c0_13, %c0_14] : memref<8x128xf32, #tpu.memory_space<vmem>>, vector<8x128xf32>
    tpu.vector_store %arg7[%c0_13, %c0_14], %22 {strides = array<i32>} : memref<8x128xf32, #tpu.memory_space<vmem>>, vector<8x128xf32>,
    return
  }
  func.func @transform_0(%arg0: i32, %arg1: i32, %arg2: memref<4xi32, #tpu.memory_space<smem>>) -> (i32, i32) {
    %c0_i32 = arith.constant 0 : i32
    %c0_i32_0 = arith.constant 0 : i32
    return %arg1, %c0_i32 : i32, i32
  }
  func.func @transform_1(%arg0: i32, %arg1: i32, %arg2: memref<4xi32, #tpu.memory_space<smem>>) -> (i32, i32) {
    %c0_i32 = arith.constant 0 : i32
    %c0_i32_0 = arith.constant 0 : i32
    %c0_i32_1 = arith.constant 0 : i32
    return %c0_i32, %c0_i32_0 : i32, i32
  }
  func.func @transform_2(%arg0: i32, %arg1: i32, %arg2: memref<4xi32, #tpu.memory_space<smem>>) -> (i32, i32, i32) {
    %0 = arith.index_cast %arg1 : i32 to index
    %1 = memref.load %arg2[%0] : memref<4xi32, #tpu.memory_space<smem>>
    %c0_i32 = arith.constant 0 : i32
    %c0_i32_0 = arith.constant 0 : i32
    %c0_i32_1 = arith.constant 0 : i32
    return %1, %c0_i32, %c0_i32_0 : i32, i32, i32
  }
  func.func @transform_3(%arg0: i32, %arg1: i32, %arg2: memref<4xi32, #tpu.memory_space<smem>>) -> (i32, i32, i32) {
    %0 = arith.index_cast %arg1 : i32 to index
    %1 = memref.load %arg2[%0] : memref<4xi32, #tpu.memory_space<smem>>
    %c0_i32 = arith.constant 0 : i32
    %c0_i32_0 = arith.constant 0 : i32
    return %1, %c0_i32, %arg0 : i32, i32, i32
  }
  func.func @transform_4(%arg0: i32, %arg1: i32, %arg2: memref<4xi32, #tpu.memory_space<smem>>) -> (i32, i32) {
    %c0_i32 = arith.constant 0 : i32
    %c0_i32_0 = arith.constant 0 : i32
    return %c0_i32, %arg0 : i32, i32
  }
}

</mosaic_0001>

<llo_original>
// kernel: tpu_custom_call.1
$region0: #{tpu_custom_call.1}
  #allocation0 [shape = 'u32[]', space=smem, size = 0x4, offset = 0x4, fixed_abs, tag = 'smem constant byte address 0x4 - core index']
  #allocation1 [shape = 'u32[72,128]{1,0:T(1,128)}', space=vmem, size = 0x9000, scoped, tag = 'internal scratch']
  #allocation2 [shape = 's32[1]{0}', space=sflag, size = 0x4, scoped, tag = 'scoped memory for tpu_custom_call.1']
  #allocation3 [shape = 'u8[512]{0}', space=smem, size = 0x200, scoped, tag = 'prefetched SMEM operand 0']
  %s0 = inlined_call_operand.hbm [shape: s32[4], index: 0, kind: input, shape index: {}]
  %s1 = inlined_call_operand.hbm [shape: bf16[512,128], index: 1, kind: input, shape index: {}]
  %s2 = inlined_call_operand.hbm [shape: s32[4,128], index: 2, kind: input, shape index: {}]
  %s3 = inlined_call_operand.hbm [shape: bf16[4,4,128], index: 3, kind: input, shape index: {}]
  %s4 = inlined_call_operand.hbm [shape: bf16[4,4,128], index: 4, kind: input, shape index: {}]
  %s5 = inlined_call_operand.hbm [shape: f32[8,128], index: 5, kind: output, shape index: {}]
  %s6 = sld [smem:[#allocation0]]
  $region69: #{tpu_custom_call.1} parent=0
    _
  %s8 = ssub.s32 1, %s6
  %s9 = scalar_select 0, %s8, %s6
  %s11 = sshll.u32 %s0, 4
  %s12 = int_to_ptr.hbm [resolvable:$true] %s11
  %14 = dma.hbm_to_smem %s12, 16, [#allocation3], [#allocation2]
  %16 = dma.done [#allocation2], 16
  %17 = sfence
  $region1: #{tpu_custom_call.1} parent=0
    #allocation4 [shape = 'u8[65536]{0}', space=vmem, size = 0x10000, scoped, tag = 'input window, operand 1']
    #allocation5 [shape = 's32[2]{0}', space=sflag, size = 0x8, scoped, tag = 'scoped memory for tpu_custom_call.1']
    #allocation6 [shape = 's32[2]{0}', space=sflag, size = 0x8, scoped, tag = 'scoped memory for tpu_custom_call.1']
    #allocation7 [shape = 'u8[2048]{0}', space=vmem, size = 0x800, scoped, tag = 'input window, operand 2, single buffered']
    #allocation8 [shape = 's32[1]{0}', space=sflag, size = 0x4, scoped, tag = 'scoped memory for tpu_custom_call.1']
    #allocation9 [shape = 'u8[2048]{0}', space=vmem, size = 0x800, scoped, tag = 'input window, operand 3']
    #allocation10 [shape = 'u8[2048]{0}', space=vmem, size = 0x800, scoped, tag = 'input window, operand 4']
    #allocation11 [shape = 'u8[4096]{0}', space=vmem, size = 0x1000, scoped, tag = 'output window, operand 0, single buffered']
    %18 = vsyncpa [#allocation5], 0
    %s19 = scalar_lea.sflag [#allocation5], 1
    %20 = vsyncpa %s19, 0
    %21 = vsyncpa [#allocation8], 0
    %22 = vsyncpa [#allocation6], 0
    loop: start=0, step=1, limit=6
    $region2: #{tpu_custom_call.1} parent=1 // loop_pre_header
      _
    $region3: #{tpu_custom_call.1} parent=1 // loop_header
      %s24 = sphi 0, %s28
      %p25 = scmp.ge.s32.totalorder %s24, 6
      %s31 = sphi 0, %s43
      %s32 = sphi 0, %s39
      %s33 = sphi 0, %s31
      %s34 = sphi 0, %s32
      %s35 = sphi 0, %s33
      %s36 = sphi 0, %s34
      %s46 = sphi 0, %s48
      %s49 = sphi 0, %s46
      %s50 = sphi 0, %s49
      %s66 = sphi 0, %s50
      %s70 = sphi 0, %s70
      %s72 = sphi 0, %s70
      %s73 = sphi 0, %s72
      %s87 = sphi 0, %s73
      %s95 = sphi 0, %s97
      %s98 = sphi 0, %s95
      %s99 = sphi 0, %s98
      %s115 = sphi 0, %s99
      %s125 = sphi 0, %s127
      %s128 = sphi 0, %s125
      %s129 = sphi 0, %s128
      %s145 = sphi 0, %s129
      %s151 = sphi 0, %s153
      %s154 = sphi 0, %s151
      %s155 = sphi 0, %s154
      %s171 = sphi 0, %s155
    $region4: #{tpu_custom_call.1} parent=1 // loop_header_branch
      %27 = sbr.rel (%p25) target = $region8
    $region5: #{tpu_custom_call.1} parent=1 // loop_body
      %s29 = ssub.s32 %s24, 1
      %s30 = ssub.s32 %s24, 2
      %s37 = sadd.s32 1, %s32
      %p38 = scmp.ge.s32.totalorder %s37, 4
      %s39 = scalar_select %p38, 0, %s37
      %s40 = sadd.s32 1, %s31
      %s41 = scalar_select %p38, %s40, %s31
      %p42 = scmp.ge.s32.totalorder %s41, 1
      %s43 = scalar_select %p42, 0, %s41
      %s44 = ssub.s32 %s32, %s39
      %p45 = scmp.eq.s32.totalorder %s44, 0
      %s47 = sadd.s32 %s46, 1
      %s48 = scalar_select %p45, %s46, %s47
      %p51 = pneg %p45
      %p52 = scmp.eq.s32.totalorder %s24, 3
      %p53 = por %p51, %p52
      %p54 = scmp.ne.s32.totalorder %s46, %s49
      %p55 = scmp.eq.s32.totalorder %s24, 0
      %p56 = por %p54, %p55
      %p57 = scmp.ne.s32.totalorder %s46, %s49
      %p58 = scmp.eq.s32.totalorder %s29, 3
      %p59 = por %p57, %p58
      %p60 = scmp.ne.s32.totalorder %s49, %s50
      %p61 = scmp.eq.s32.totalorder %s29, 0
      %p62 = por %p60, %p61
      %p63 = scmp.ne.s32.totalorder %s49, %s50
      %p64 = scmp.eq.s32.totalorder %s30, 3
      %p65 = por %p63, %p64
      %p67 = scmp.ne.s32.totalorder %s50, %s66
      %p68 = scmp.eq.s32.totalorder %s30, 0
      %p69 = por %p67, %p68
      %s71 = sadd.s32 %s70, 1
      %p74 = scmp.eq.s32.totalorder %s24, 3
      %p75 = scmp.ne.s32.totalorder %s70, %s72
      %p76 = scmp.eq.s32.totalorder %s24, 0
      %p77 = por %p75, %p76
      %p78 = scmp.ne.s32.totalorder %s70, %s72
      %p79 = scmp.eq.s32.totalorder %s29, 3
      %p80 = por %p78, %p79
      %p81 = scmp.ne.s32.totalorder %s72, %s73
      %p82 = scmp.eq.s32.totalorder %s29, 0
      %p83 = por %p81, %p82
      %p84 = scmp.ne.s32.totalorder %s72, %s73
      %p85 = scmp.eq.s32.totalorder %s30, 3
      %p86 = por %p84, %p85
      %p88 = scmp.ne.s32.totalorder %s73, %s87
      %p89 = scmp.eq.s32.totalorder %s30, 0
      %p90 = por %p88, %p89
      %s91 = sld [smem:[#allocation3 + %s32]]
      %s92 = sld [smem:[#allocation3 + %s39]]
      %s93 = ssub.s32 %s91, %s92
      %p94 = scmp.eq.s32.totalorder %s93, 0
      %s96 = sadd.s32 %s95, 1
      %s97 = scalar_select %p94, %s95, %s96
      %p100 = pneg %p94
      %p101 = scmp.eq.s32.totalorder %s24, 3
      %p102 = por %p100, %p101
      %p103 = scmp.ne.s32.totalorder %s95, %s98
      %p104 = scmp.eq.s32.totalorder %s24, 0
      %p105 = por %p103, %p104
      %p106 = scmp.ne.s32.totalorder %s95, %s98
      %p107 = scmp.eq.s32.totalorder %s29, 3
      %p108 = por %p106, %p107
      %p109 = scmp.ne.s32.totalorder %s98, %s99
      %p110 = scmp.eq.s32.totalorder %s29, 0
      %p111 = por %p109, %p110
      %p112 = scmp.ne.s32.totalorder %s98, %s99
      %p113 = scmp.eq.s32.totalorder %s30, 3
      %p114 = por %p112, %p113
      %p116 = scmp.ne.s32.totalorder %s99, %s115
      %p117 = scmp.eq.s32.totalorder %s30, 0
      %p118 = por %p116, %p117
      %s119 = sld [smem:[#allocation3 + %s32]]
      %s120 = sld [smem:[#allocation3 + %s39]]
      %s121 = ssub.s32 %s119, %s120
      %s122 = ssub.s32 %s31, %s43
      %s123 = sor.u32 %s121, %s122
      %p124 = scmp.eq.s32.totalorder %s123, 0
      %s126 = sadd.s32 %s125, 1
      %s127 = scalar_select %p124, %s125, %s126
      %p130 = pneg %p124
      %p131 = scmp.eq.s32.totalorder %s24, 3
      %p132 = por %p130, %p131
      %p133 = scmp.ne.s32.totalorder %s125, %s128
      %p134 = scmp.eq.s32.totalorder %s24, 0
      %p135 = por %p133, %p134
      %p136 = scmp.ne.s32.totalorder %s125, %s128
      %p137 = scmp.eq.s32.totalorder %s29, 3
      %p138 = por %p136, %p137
      %p139 = scmp.ne.s32.totalorder %s128, %s129
      %p140 = scmp.eq.s32.totalorder %s29, 0
      %p141 = por %p139, %p140
      %p142 = scmp.ne.s32.totalorder %s128, %s129
      %p143 = scmp.eq.s32.totalorder %s30, 3
      %p144 = por %p142, %p143
      %p146 = scmp.ne.s32.totalorder %s129, %s145
      %p147 = scmp.eq.s32.totalorder %s30, 0
      %p148 = por %p146, %p147
      %s149 = ssub.s32 %s31, %s43
      %p150 = scmp.eq.s32.totalorder %s149, 0
      %s152 = sadd.s32 %s151, 1
      %s153 = scalar_select %p150, %s151, %s152
      %p156 = pneg %p150
      %p157 = scmp.eq.s32.totalorder %s24, 3
      %p158 = por %p156, %p157
      %p159 = scmp.ne.s32.totalorder %s151, %s154
      %p160 = scmp.eq.s32.totalorder %s24, 0
      %p161 = por %p159, %p160
      %p162 = scmp.ne.s32.totalorder %s151, %s154
      %p163 = scmp.eq.s32.totalorder %s29, 3
      %p164 = por %p162, %p163
      %p165 = scmp.ne.s32.totalorder %s154, %s155
      %p166 = scmp.eq.s32.totalorder %s29, 0
      %p167 = por %p165, %p166
      %p168 = scmp.ne.s32.totalorder %s154, %s155
      %p169 = scmp.eq.s32.totalorder %s30, 3
      %p170 = por %p168, %p169
      %p172 = scmp.ne.s32.totalorder %s155, %s171
      %p173 = scmp.eq.s32.totalorder %s30, 0
      %p174 = por %p172, %p173
      %p175 = scmp.le.s32.totalorder 1, %s24
      %p176 = scmp.lt.s32.totalorder %s24, 5
      %p177 = pnand %p175, %p176
      %p178 = pneg %p177
      // Predicated region
      $region9: #{tpu_custom_call.1} parent=5 // pred_check
        _
      $region10: #{tpu_custom_call.1} parent=5 // pred_check_branch
        %180 = sbr.rel (%p177) target = $region12
      $region11: #{tpu_custom_call.1} parent=5 // pred_region
        %s181 = ssub.s32 %s24, 1
        // Predicated region
        $region13: #{tpu_custom_call.1} parent=11 // pred_check
          %p182 = pneg %p83
        $region14: #{tpu_custom_call.1} parent=11 // pred_check_branch
          %184 = sbr.rel (%p182) target = $region16
        $region15: #{tpu_custom_call.1} parent=11 // pred_region
          %186 = vsyncadd [#allocation8], 0
          %s188 = sshll.u32 %s2, 4
          %s189 = int_to_ptr.hbm [resolvable:$true] %s188
          %s190 = sshll.u32 [#allocation7], 4
          %s191 = int_to_ptr.vmem [resolvable:$true] %s190
          %193 = dma.hbm_to_vmem [thread:$0]  %s189, 64, %s191, [#allocation8]
        $region16: #{tpu_custom_call.1} parent=11 // pred_fallthru
          _
      $region12: #{tpu_custom_call.1} parent=5 // pred_fallthru
        _
      %p194 = scmp.lt.s32.totalorder %s24, 4
      // Predicated region
      $region17: #{tpu_custom_call.1} parent=5 // pred_check
        %p195 = pneg %p194
      $region18: #{tpu_custom_call.1} parent=5 // pred_check_branch
        %197 = sbr.rel (%p195) target = $region20
      $region19: #{tpu_custom_call.1} parent=5 // pred_region
        // Predicated region
        $region21: #{tpu_custom_call.1} parent=19 // pred_check
          %p198 = pneg %p56
        $region22: #{tpu_custom_call.1} parent=19 // pred_check_branch
          %200 = sbr.rel (%p198) target = $region24
        $region23: #{tpu_custom_call.1} parent=19 // pred_region
          %s201 = sand.u32 %s24, 1
          %s202 = scalar_lea.sflag [#allocation5], %s201
          %s203 = sand.u32 %s46, 1
          %s204 = smul.addr %s203, 64
          %s205 = scalar_lea.vmem [#allocation4], %s204
          %s206 = smul.u32 16, %s32
          %208 = vsyncadd %s202, 0
          %s209 = smul.addr %s206, 4
          %s210 = scalar_lea.hbm %s1, %s209
          %s211 = sshll.u32 %s210, 4
          %s212 = int_to_ptr.hbm [resolvable:$true] %s211
          %s213 = sshll.u32 %s205, 4
          %s214 = int_to_ptr.vmem [resolvable:$true] %s213
          %219 = dma.hbm_to_vmem [thread:$0]  %s212, 1024, %s214, %s202, 64, 64, 4
        $region24: #{tpu_custom_call.1} parent=19 // pred_fallthru
          _
        // Predicated region
        $region25: #{tpu_custom_call.1} parent=19 // pred_check
          %p220 = pneg %p105
        $region26: #{tpu_custom_call.1} parent=19 // pred_check_branch
          %222 = sbr.rel (%p220) target = $region28
        $region27: #{tpu_custom_call.1} parent=19 // pred_region
          %s223 = sand.u32 %s24, 1
          %s224 = scalar_lea.sflag [#allocation5], %s223
          %s225 = sand.u32 %s95, 1
          %s226 = smul.addr %s225, 2
          %s227 = scalar_lea.vmem [#allocation9], %s226
          %s228 = sld [smem:[#allocation3 + %s32]]
          %230 = vsyncadd %s224, 0
          %s231 = smul.addr %s228, 2
          %s232 = scalar_lea.hbm %s3, %s231
          %s234 = sshll.u32 %s232, 4
          %s235 = int_to_ptr.hbm [resolvable:$true] %s234
          %s236 = sshll.u32 %s227, 4
          %s237 = int_to_ptr.vmem [resolvable:$true] %s236
          %239 = dma.hbm_to_vmem [thread:$0]  %s235, 32, %s237, %s224
        $region28: #{tpu_custom_call.1} parent=19 // pred_fallthru
          _
        // Predicated region
        $region29: #{tpu_custom_call.1} parent=19 // pred_check
          %p240 = pneg %p135
        $region30: #{tpu_custom_call.1} parent=19 // pred_check_branch
          %242 = sbr.rel (%p240) target = $region32
        $region31: #{tpu_custom_call.1} parent=19 // pred_region
          %s243 = sand.u32 %s24, 1
          %s244 = scalar_lea.sflag [#allocation5], %s243
          %s245 = sand.u32 %s125, 1
          %s246 = smul.addr %s245, 2
          %s247 = scalar_lea.vmem [#allocation10], %s246
          %s248 = sld [smem:[#allocation3 + %s32]]
          %250 = vsyncadd %s244, 0
          %s251 = sadd.s32 %s31, %s248
          %s252 = smul.addr %s251, 2
          %s253 = scalar_lea.hbm %s4, %s252
          %s255 = sshll.u32 %s253, 4
          %s256 = int_to_ptr.hbm [resolvable:$true] %s255
          %s257 = sshll.u32 %s247, 4
          %s258 = int_to_ptr.vmem [resolvable:$true] %s257
          %260 = dma.hbm_to_vmem [thread:$0]  %s256, 32, %s258, %s244
        $region32: #{tpu_custom_call.1} parent=19 // pred_fallthru
          _
      $region20: #{tpu_custom_call.1} parent=5 // pred_fallthru
        _
      %p261 = scmp.le.s32.totalorder 1, %s24
      %p262 = scmp.lt.s32.totalorder %s24, 5
      %p263 = pnand %p261, %p262
      %p264 = pneg %p263
      // Predicated region
      $region33: #{tpu_custom_call.1} parent=5 // pred_check
        _
      $region34: #{tpu_custom_call.1} parent=5 // pred_check_branch
        %266 = sbr.rel (%p263) target = $region36
      $region35: #{tpu_custom_call.1} parent=5 // pred_region
        %s267 = ssub.s32 %s24, 1
        %s268 = sand.u32 %s29, 1
        %s269 = scalar_lea.sflag [#allocation5], %s268
        %s270 = sand.u32 %s49, 1
        %s271 = smul.addr %s270, 64
        %s272 = scalar_lea.vmem [#allocation4], %s271
        // Predicated region
        $region37: #{tpu_custom_call.1} parent=35 // pred_check
          %p273 = pneg %p62
        $region38: #{tpu_custom_call.1} parent=35 // pred_check_branch
          %275 = sbr.rel (%p273) target = $region40
        $region39: #{tpu_custom_call.1} parent=35 // pred_region
          %277 = dma.done %s269, 1024
        $region40: #{tpu_custom_call.1} parent=35 // pred_fallthru
          _
        // Predicated region
        $region41: #{tpu_custom_call.1} parent=35 // pred_check
          %p278 = pneg %p83
        $region42: #{tpu_custom_call.1} parent=35 // pred_check_branch
          %280 = sbr.rel (%p278) target = $region44
        $region43: #{tpu_custom_call.1} parent=35 // pred_region
          %282 = dma.done [#allocation8], 64
        $region44: #{tpu_custom_call.1} parent=35 // pred_fallthru
          _
        %s283 = sand.u32 %s29, 1
        %s284 = scalar_lea.sflag [#allocation5], %s283
        %s285 = sand.u32 %s98, 1
        %s286 = smul.addr %s285, 2
        %s287 = scalar_lea.vmem [#allocation9], %s286
        // Predicated region
        $region45: #{tpu_custom_call.1} parent=35 // pred_check
          %p288 = pneg %p111
        $region46: #{tpu_custom_call.1} parent=35 // pred_check_branch
          %290 = sbr.rel (%p288) target = $region48
        $region47: #{tpu_custom_call.1} parent=35 // pred_region
          %292 = dma.done %s284, 32
        $region48: #{tpu_custom_call.1} parent=35 // pred_fallthru
          _
        %s293 = sand.u32 %s29, 1
        %s294 = scalar_lea.sflag [#allocation5], %s293
        %s295 = sand.u32 %s128, 1
        %s296 = smul.addr %s295, 2
        %s297 = scalar_lea.vmem [#allocation10], %s296
        // Predicated region
        $region49: #{tpu_custom_call.1} parent=35 // pred_check
          %p298 = pneg %p141
        $region50: #{tpu_custom_call.1} parent=35 // pred_check_branch
          %300 = sbr.rel (%p298) target = $region52
        $region51: #{tpu_custom_call.1} parent=35 // pred_region
          %302 = dma.done %s294, 32
        $region52: #{tpu_custom_call.1} parent=35 // pred_fallthru
          _
        %s303 = sand.u32 %s29, 1
        %s304 = scalar_lea.sflag [#allocation5], %s303
        %s305 = sand.u32 %s49, 1
        %s306 = smul.addr %s305, 64
        %s307 = scalar_lea.vmem [#allocation4], %s306
        %p308 = pneg %p62
        %p309 = pneg %p59
        %p310 = pneg %p83
        %p311 = pneg %p80
        %s312 = sand.u32 %s29, 1
        %s313 = scalar_lea.sflag [#allocation5], %s312
        %s314 = sand.u32 %s98, 1
        %s315 = smul.addr %s314, 2
        %s316 = scalar_lea.vmem [#allocation9], %s315
        %p317 = pneg %p111
        %p318 = pneg %p108
        %s319 = sand.u32 %s29, 1
        %s320 = scalar_lea.sflag [#allocation5], %s319
        %s321 = sand.u32 %s128, 1
        %s322 = smul.addr %s321, 2
        %s323 = scalar_lea.vmem [#allocation10], %s322
        %p324 = pneg %p141
        %p325 = pneg %p138
        %p326 = pneg %p167
        %p327 = pneg %p164
        %s328 = smul.u32 16, %s34
        %s329 = sld [smem:[#allocation3 + %s34]]
        %s330 = sld [smem:[#allocation3 + %s34]]
        %p332 = scmp.eq.s32.totalorder %s34, 0
        // Predicated region
        $region53: #{tpu_custom_call.1} parent=35 // pred_check
          %p333 = pneg %p332
        $region54: #{tpu_custom_call.1} parent=35 // pred_check_branch
          %335 = sbr.rel (%p333) target = $region56
        $region55: #{tpu_custom_call.1} parent=35 // pred_region
          %336 = vst [vmem:[#allocation11] sm:$0xff] 0.0
        $region56: #{tpu_custom_call.1} parent=35 // pred_fallthru
          _
        %v337 = vld [vmem:[%s272] sm:$0xf]
        %v338 = vld [vmem:[%s272 + $0x4] sm:$0xf]
        %v339 = vld [vmem:[%s272 + $0x8] sm:$0xf]
        %v340 = vld [vmem:[%s272 + $0xc] sm:$0xf]
        %v341 = vld [vmem:[%s272 + $0x10] sm:$0xf]
        %v342 = vld [vmem:[%s272 + $0x14] sm:$0xf]
        %v343 = vld [vmem:[%s272 + $0x18] sm:$0xf]
        %v344 = vld [vmem:[%s272 + $0x1c] sm:$0xf]
        %v345 = vld [vmem:[%s272 + $0x20] sm:$0xf]
        %v346 = vld [vmem:[%s272 + $0x24] sm:$0xf]
        %v347 = vld [vmem:[%s272 + $0x28] sm:$0xf]
        %v348 = vld [vmem:[%s272 + $0x2c] sm:$0xf]
        %v349 = vld [vmem:[%s272 + $0x30] sm:$0xf]
        %v350 = vld [vmem:[%s272 + $0x34] sm:$0xf]
        %v351 = vld [vmem:[%s272 + $0x38] sm:$0xf]
        %v352 = vld [vmem:[%s272 + $0x3c] sm:$0xf]
        %v353 = vld [vmem:[%s287] sm:$0x3]
        %v354 = vld [vmem:[%s297] sm:$0x3]
        %v371 = vunpack.c.l.b16 %v337
        %v372 = vunpack.c.l.b16 %v338
        %v373 = vunpack.c.l.b16 %v339
        %v374 = vunpack.c.l.b16 %v340
        %v375 = vunpack.c.l.b16 %v341
        %v376 = vunpack.c.l.b16 %v342
        %v377 = vunpack.c.l.b16 %v343
        %v378 = vunpack.c.l.b16 %v344
        %v379 = vunpack.c.l.b16 %v345
        %v380 = vunpack.c.l.b16 %v346
        %v381 = vunpack.c.l.b16 %v347
        %v382 = vunpack.c.l.b16 %v348
        %v383 = vunpack.c.l.b16 %v349
        %v384 = vunpack.c.l.b16 %v350
        %v385 = vunpack.c.l.b16 %v351
        %v386 = vunpack.c.l.b16 %v352
        %v387 = vpack.c.b16 %v372, %v371
        %v388 = vpack.c.b16 %v374, %v373
        %v389 = vpack.c.b16 %v376, %v375
        %v390 = vpack.c.b16 %v378, %v377
        %v391 = vpack.c.b16 %v380, %v379
        %v392 = vpack.c.b16 %v382, %v381
        %v393 = vpack.c.b16 %v384, %v383
        %v394 = vpack.c.b16 %v386, %v385
        %403 = vmatpush.bf16.xpose.msra.mxu0 0
        %404 = vmatpush.bf16.xpose.msra.mxu0 0
        %405 = vmatpush.bf16.xpose.msra.mxu0 0
        %406 = vmatpush.bf16.xpose.msra.mxu0 0
        %407 = vmatpush.bf16.xpose.msra.mxu0 0
        %408 = vmatpush.bf16.xpose.msra.mxu0 0
        %409 = vmatpush.bf16.xpose.msra.mxu0 0
        %410 = vmatpush.bf16.xpose.msra.mxu0 %v353
        %411 = vmatmul.bf16.gmra.mxu0 %v387
        %v412 = vpop.f32.mrf.mxu0
        %v413 = vadd.f32 0.0, %v412
        %v414 = vpop.f32.mrf.mxu0
        %v415 = vadd.f32 0.0, %v414
        %416 = vmatmul.bf16.gmra.mxu0 %v388
        %v417 = vpop.f32.mrf.mxu0
        %v418 = vadd.f32 0.0, %v417
        %v419 = vpop.f32.mrf.mxu0
        %v420 = vadd.f32 0.0, %v419
        %421 = vmatmul.bf16.gmra.mxu0 %v389
        %v422 = vpop.f32.mrf.mxu0
        %v423 = vadd.f32 0.0, %v422
        %v424 = vpop.f32.mrf.mxu0
        %v425 = vadd.f32 0.0, %v424
        %426 = vmatmul.bf16.gmra.mxu0 %v390
        %v427 = vpop.f32.mrf.mxu0
        %v428 = vadd.f32 0.0, %v427
        %v429 = vpop.f32.mrf.mxu0
        %v430 = vadd.f32 0.0, %v429
        %431 = vmatmul.bf16.gmra.mxu0 %v391
        %v432 = vpop.f32.mrf.mxu0
        %v433 = vadd.f32 0.0, %v432
        %v434 = vpop.f32.mrf.mxu0
        %v435 = vadd.f32 0.0, %v434
        %436 = vmatmul.bf16.gmra.mxu0 %v392
        %v437 = vpop.f32.mrf.mxu0
        %v438 = vadd.f32 0.0, %v437
        %v439 = vpop.f32.mrf.mxu0
        %v440 = vadd.f32 0.0, %v439
        %441 = vmatmul.bf16.gmra.mxu0 %v393
        %v442 = vpop.f32.mrf.mxu0
        %v443 = vadd.f32 0.0, %v442
        %v444 = vpop.f32.mrf.mxu0
        %v445 = vadd.f32 0.0, %v444
        %446 = vmatmul.bf16.gmra.mxu0 %v394
        %v447 = vpop.f32.mrf.mxu0
        %v448 = vadd.f32 0.0, %v447
        %v449 = vpop.f32.mrf.mxu0
        %v450 = vadd.f32 0.0, %v449
        %451 = vdwg.mxu0
        %v452 = vpack.c.bf16 %v415, %v413
        %v453 = vpack.c.bf16 %v420, %v418
        %v454 = vpack.c.bf16 %v425, %v423
        %v455 = vpack.c.bf16 %v430, %v428
        %v456 = vpack.c.bf16 %v435, %v433
        %v457 = vpack.c.bf16 %v440, %v438
        %v458 = vpack.c.bf16 %v445, %v443
        %v459 = vpack.c.bf16 %v450, %v448
        %vm460 = vcmask 31744
        %v462 = vsel %vm460, %v452, 0
        %v465 = vsel %vm460, %v453, 0
        %v468 = vsel %vm460, %v454, 0
        %v471 = vsel %vm460, %v455, 0
        %v474 = vsel %vm460, %v456, 0
        %v477 = vsel %vm460, %v457, 0
        %v480 = vsel %vm460, %v458, 0
        %v483 = vsel %vm460, %v459, 0
        %vm485 = vcmask 1041408
        %v487 = vsel %vm485, %v354, 0
        %489 = vmatpush.bf16.msra.mxu0 0
        %490 = vmatpush.bf16.msra.mxu0 0
        %491 = vmatpush.bf16.msra.mxu0 0
        %492 = vmatpush.bf16.msra.mxu0 0
        %493 = vmatpush.bf16.msra.mxu0 0
        %494 = vmatpush.bf16.msra.mxu0 0
        %495 = vmatpush.bf16.msra.mxu0 0
        %496 = vmatpush.bf16.msra.mxu0 %v487
        %497 = vmatmul.bf16.gmra.mxu0 %v462
        %v498 = vpop.f32.mrf.mxu0
        %v499 = vadd.f32 0.0, %v498
        %v500 = vpop.f32.mrf.mxu0
        %v501 = vadd.f32 0.0, %v500
        %502 = vmatmul.bf16.gmra.mxu0 %v465
        %v503 = vpop.f32.mrf.mxu0
        %v504 = vadd.f32 0.0, %v503
        %v505 = vpop.f32.mrf.mxu0
        %v506 = vadd.f32 0.0, %v505
        %507 = vmatmul.bf16.gmra.mxu0 %v468
        %v508 = vpop.f32.mrf.mxu0
        %v509 = vadd.f32 0.0, %v508
        %v510 = vpop.f32.mrf.mxu0
        %v511 = vadd.f32 0.0, %v510
        %512 = vmatmul.bf16.gmra.mxu0 %v471
        %v513 = vpop.f32.mrf.mxu0
        %v514 = vadd.f32 0.0, %v513
        %v515 = vpop.f32.mrf.mxu0
        %v516 = vadd.f32 0.0, %v515
        %517 = vmatmul.bf16.gmra.mxu0 %v474
        %v518 = vpop.f32.mrf.mxu0
        %v519 = vadd.f32 0.0, %v518
        %v520 = vpop.f32.mrf.mxu0
        %v521 = vadd.f32 0.0, %v520
        %522 = vmatmul.bf16.gmra.mxu0 %v477
        %v523 = vpop.f32.mrf.mxu0
        %v524 = vadd.f32 0.0, %v523
        %v525 = vpop.f32.mrf.mxu0
        %v526 = vadd.f32 0.0, %v525
        %527 = vmatmul.bf16.gmra.mxu0 %v480
        %v528 = vpop.f32.mrf.mxu0
        %v529 = vadd.f32 0.0, %v528
        %v530 = vpop.f32.mrf.mxu0
        %v531 = vadd.f32 0.0, %v530
        %532 = vmatmul.bf16.gmra.mxu0 %v483
        %v533 = vpop.f32.mrf.mxu0
        %v534 = vadd.f32 0.0, %v533
        %v535 = vpop.f32.mrf.mxu0
        %v536 = vadd.f32 0.0, %v535
        %537 = vdwg.mxu0
        %s538 = scalar_lea.vmem [#allocation7], %s34
        %v539 = vld [vmem:[%s538] sm:$0x1]
        %v540 = vlaneseq
        %v541 = vshrl.u32 %v540, 7
        %v542 = vperm.slane %v539, 0
        %vm543 = vcmp.eq.s32.totalorder %v541, %v542
        %v544 = vsel %vm543, 1, 0
        %v545 = vcvt.s32.f32 %v544
        %v546 = vpack.c.bf16 %v545, %v545
        %v547 = vld [vmem:[#allocation11] sm:$0xff]
        %v548 = vpack.c.bf16 %v501, %v499
        %v549 = vpack.c.bf16 %v506, %v504
        %v550 = vpack.c.bf16 %v511, %v509
        %v551 = vpack.c.bf16 %v516, %v514
        %v552 = vpack.c.bf16 %v521, %v519
        %v553 = vpack.c.bf16 %v526, %v524
        %v554 = vpack.c.bf16 %v531, %v529
        %v555 = vpack.c.bf16 %v536, %v534
        %556 = vmatpush.bf16.msra.mxu0 %v555
        %557 = vmatpush.bf16.msra.mxu0 %v554
        %558 = vmatpush.bf16.msra.mxu0 %v553
        %559 = vmatpush.bf16.msra.mxu0 %v552
        %560 = vmatpush.bf16.msra.mxu0 %v551
        %561 = vmatpush.bf16.msra.mxu0 %v550
        %562 = vmatpush.bf16.msra.mxu0 %v549
        %563 = vmatpush.bf16.msra.mxu0 %v548
        %564 = vmatmul.bf16.gmra.mxu0 %v546
        %v565 = vpop.f32.mrf.mxu0
        %v566 = vadd.f32 0.0, %v565
        %v567 = vpop.f32.mrf.mxu0
        %568 = vdwg.mxu0
        %v569 = vadd.f32 %v547, %v566
        %570 = vst [vmem:[#allocation11] sm:$0xff] %v569
        // Predicated region
        $region57: #{tpu_custom_call.1} parent=35 // pred_check
          %p571 = pneg %p164
        $region58: #{tpu_custom_call.1} parent=35 // pred_check_branch
          %573 = sbr.rel (%p571) target = $region60
        $region59: #{tpu_custom_call.1} parent=35 // pred_region
          %575 = vsyncadd [#allocation6], 0
          %s576 = smul.addr %s33, 8
          %s577 = scalar_lea.hbm %s5, %s576
          %s579 = sshll.u32 [#allocation11], 4
          %s580 = int_to_ptr.vmem [resolvable:$true] %s579
          %s581 = sshll.u32 %s577, 4
          %s582 = int_to_ptr.hbm [resolvable:$true] %s581
          %584 = dma.vmem_to_hbm [thread:$0]  %s580, 128, %s582, [#allocation6]
        $region60: #{tpu_custom_call.1} parent=35 // pred_fallthru
          _
        // Predicated region
        $region61: #{tpu_custom_call.1} parent=35 // pred_check
          %p585 = pneg %p164
        $region62: #{tpu_custom_call.1} parent=35 // pred_check_branch
          %587 = sbr.rel (%p585) target = $region64
        $region63: #{tpu_custom_call.1} parent=35 // pred_region
          %589 = dma.done [#allocation6], 128
        $region64: #{tpu_custom_call.1} parent=35 // pred_fallthru
          _
      $region36: #{tpu_custom_call.1} parent=5 // pred_fallthru
        _
      %p590 = scmp.le.s32.totalorder 2, %s24
      // Predicated region
      $region65: #{tpu_custom_call.1} parent=5 // pred_check
        %p591 = pneg %p590
      $region66: #{tpu_custom_call.1} parent=5 // pred_check_branch
        %593 = sbr.rel (%p591) target = $region68
      $region67: #{tpu_custom_call.1} parent=5 // pred_region
        %s594 = ssub.s32 %s24, 2
      $region68: #{tpu_custom_call.1} parent=5 // pred_fallthru
        _
    $region6: #{tpu_custom_call.1} parent=1 // loop_footer
      %s28 = sadd.s32 1, %s24
    $region7: #{tpu_custom_call.1} parent=1 // loop_footer_branch
      %23 = sbr.rel target = $region3
    $region8: #{tpu_custom_call.1} parent=1 // loop_exit
      _
    %595 = vsyncpa [#allocation5], 1
    %s596 = scalar_lea.sflag [#allocation5], 1
    %597 = vsyncpa %s596, 1
    %598 = vsyncpa [#allocation8], 1
    %599 = vsyncpa [#allocation6], 1
    %s600 = scalar_lea.sflag [#allocation6], 1
    %601 = vsyncpa %s600, 1

</llo_original>
